<compile_context>
chip_gen: v7x
topology: tpu7x:2x2x1
jax: 0.10.0
libtpu: 0.0.40
codegen_flags: <defaults>
</compile_context>

<pallas_src>
import functools

import jax
import jax.numpy as jnp
from jax.experimental import pallas as pl
from jax.experimental.pallas import tpu as pltpu


def _bce_elementwise(z, y):
    """Numerically stable BCE-with-logits (same formula PyTorch uses)."""
    z = z.astype(jnp.float32)
    y = y.astype(jnp.float32)
    # max(z, 0) - z*y + log1p(exp(-|z|))
    return jnp.maximum(z, 0.0) - z * y + jnp.log1p(jnp.exp(-jnp.abs(z)))


def _bce_sum_kernel(z_ref, y_ref, out_ref, acc_ref, *, n_rows, block_rows, sub):
    c = pl.program_id(0)          # TensorCore split (size 1 on single-TC chips)
    i = pl.program_id(1)          # reduction step within this split
    steps = pl.num_programs(1)

    @pl.when(i == 0)
    def _():
        acc_ref[...] = jnp.zeros_like(acc_ref)

    # Global row index of the first row of this block; rows >= n_rows are
    # masked out (handles the ragged last block and fully out-of-range blocks
    # of the second split) -- no wrapper-side padding needed.
    row0 = (c * steps + i) * block_rows
    valid = n_rows - row0

    def body(j, carry):
        r = pl.multiple_of(j * sub, sub)
        z = z_ref[pl.ds(r, sub), :]
        y = y_ref[pl.ds(r, sub), :]
        # TODO(synk): on v7x, if EUP becomes the critical slot, compute the
        # log1p(exp(-|z|)) softplus term in bf16 and accumulate in f32.
        loss = _bce_elementwise(z, y)
        row_ids = jax.lax.broadcasted_iota(jnp.int32, (sub, 1), 0) + r
        loss = jnp.where(row_ids < valid, loss, 0.0)
        acc_ref[...] += loss       # pure VPU adds into the VMEM accumulator
        return carry

    jax.lax.fori_loop(0, block_rows // sub, body, 0)

    # Single cross-lane/sublane reduce, only on the last reduction step.
    @pl.when(i == steps - 1)
    def _():
        out_ref[...] = jnp.full(out_ref.shape, jnp.sum(acc_ref[...]),
                                dtype=jnp.float32)


def _num_core_splits():
    """2 on multi-TensorCore chips (v7x / v4 / v5p), else 1.

    On single-TC chips a size-2 'parallel' axis buys nothing but adds an extra
    accumulator drain + partial sum, so it is skipped there.
    """
    # TODO(synk): verify on v7x (xprof per-core occupancy) that the 'parallel'
    # axis actually shards across both TensorCores; fall back to
    # pltpu.CORE_PARALLEL / pl.core_map if it does not.
    try:
        kind = jax.devices()[0].device_kind.lower()
    except Exception:
        return 1
    if any(tag in kind for tag in ("v7", "7x", "v4", "v5p")):
        return 2
    return 1


def _round_up(v, m):
    return ((v + m - 1) // m) * m


def bce_loss_pallas(recon_x, x, feature_dim):
    """Equivalent of BCE_loss(feature_dim)(recon_x, x) -> scalar float32.

    The PyTorch module views inputs as (-1, feature_dim) before a 'sum'
    reduction; the sum is invariant to that view, so we compute on a
    lane-dense (rows, LANE) slab for throughput. Narrow (bf16/f16) inputs are
    streamed as-is; the kernel casts to f32 per sub-chunk.
    """
    total = recon_x.size
    assert total > 0
    assert total % feature_dim == 0, "element count must be divisible by feature_dim"
    assert x.size == total

    zf = recon_x.reshape(-1)
    yf = x.reshape(-1)

    # ---- lane-dense layout: pick LANE from divisors of total (zero-copy) ----
    LANE = 0
    for cand in (1024, 512, 256, 128):
        if total % cand == 0 and total // cand >= 8:
            LANE = cand
            break
    if LANE == 0:
        for cand in (1024, 512, 256, 128):
            if total % cand == 0:
                LANE = cand
                break

    tail_loss = jnp.zeros((), jnp.float32)
    if LANE == 0:
        # Ragged case (total not a multiple of 128): reduce the <128-element
        # tail in XLA and stream only the 128-aligned body through the kernel.
        LANE = 128
        body_elems = (total // LANE) * LANE
        if body_elems == 0:
            return jnp.sum(_bce_elementwise(zf, yf))
        tail_loss = jnp.sum(_bce_elementwise(zf[body_elems:], yf[body_elems:]))
        # TODO(synk): this slice copies the body once; rare path (only when
        # total % 128 != 0) -- typical NN shapes take the zero-copy branch.
        zf = zf[:body_elems]
        yf = yf[:body_elems]
        total = body_elems

    n_rows = total // LANE
    z2d = zf.reshape(n_rows, LANE)
    y2d = yf.reshape(n_rows, LANE)

    # ---- tile sizing ---------------------------------------------------------
    sub_of = lambda itemsize: {4: 8, 2: 16, 1: 32}.get(itemsize, 8)
    sublane = max(sub_of(jnp.dtype(recon_x.dtype).itemsize),
                  sub_of(jnp.dtype(x.dtype).itemsize))

    TARGET_BLOCK_ELEMS = 2048 * 1024            # ~8 MiB / input block at f32
    max_block_rows = max(TARGET_BLOCK_ELEMS // LANE, sublane)
    block_rows = min(max_block_rows, _round_up(n_rows, sublane))
    block_rows = _round_up(block_rows, sublane)

    SUB = sublane                                # inner fori_loop chunk rows
    for cand in (64, 32, 16, 8):
        if cand % sublane == 0 and block_rows % cand == 0:
            SUB = cand
            break

    N_SPLIT = _num_core_splits()
    steps_per_split = pl.cdiv(n_rows, N_SPLIT * block_rows)

    kernel = functools.partial(
        _bce_sum_kernel, n_rows=n_rows, block_rows=block_rows, sub=SUB)

    in_map = lambda c, i: (c * steps_per_split + i, 0)

    out = pl.pallas_call(
        kernel,
        out_shape=jax.ShapeDtypeStruct((N_SPLIT, 1, 128), jnp.float32),
        grid_spec=pltpu.PrefetchScalarGridSpec(
            num_scalar_prefetch=0,
            grid=(N_SPLIT, steps_per_split),
            in_specs=[
                pl.BlockSpec((block_rows, LANE), in_map),
                pl.BlockSpec((block_rows, LANE), in_map),
            ],
            out_specs=pl.BlockSpec((1, 1, 128), lambda c, i: (c, 0, 0)),
            scratch_shapes=[pltpu.VMEM((SUB, LANE), jnp.float32)],
        ),
        compiler_params=pltpu.CompilerParams(
            dimension_semantics=("parallel", "arbitrary"),
            # 2 inputs x 2 pipeline buffers x <=8 MiB blocks = <=32 MiB (+ small
            # scratch): 48 MiB stays inside v7x's 64 MiB physical VMEM with
            # headroom, and is well above v5e's 16 MiB default scoped limit.
            vmem_limit_bytes=48 * 1024 * 1024,
        ),
    )(z2d, y2d)

    # One partial per split; final tiny reduce in XLA.
    # reduction='sum' gives a scalar; .mean() of a scalar is the identity.
    return jnp.sum(out[:, 0, 0]) + tail_loss


def bce_loss_reference(recon_x, x, feature_dim):
    z = recon_x.reshape(-1, feature_dim)
    y = x.reshape(-1, feature_dim)
    return jnp.sum(_bce_elementwise(z, y))


if __name__ == "__main__":
    # Small NCHW-shaped inputs: batch=2, channels=4, spatial=16x16.
    # feature_dim = 16 (matches the module's view(-1, feature_dim)).
    feature_dim = 16
    key = jax.random.PRNGKey(0)
    k1, k2 = jax.random.split(key)
    recon_x = jax.random.normal(k1, (2, 4, 16, 16), dtype=jnp.float32)   # logits
    x = jax.random.uniform(k2, (2, 4, 16, 16), dtype=jnp.float32)        # targets in [0, 1]

    fn = jax.jit(functools.partial(bce_loss_pallas, feature_dim=feature_dim))
    loss = jax.block_until_ready(fn(recon_x, x))
    ref = jax.block_until_ready(bce_loss_reference(recon_x, x, feature_dim))

    assert jnp.allclose(loss, ref, rtol=1e-5, atol=1e-3), (loss, ref)
    print("KERNEL_OK")
</pallas_src>

<mosaic_0001>
module attributes {stable_mosaic.version = 11 : i64} {
  func.func @_bce_sum_kernel(%arg0: i32, %arg1: i32, %arg2: memref<8x256xf32, #tpu.memory_space<vmem>>, %arg3: memref<8x256xf32, #tpu.memory_space<vmem>>, %arg4: memref<1x1x128xf32, #tpu.memory_space<vmem>>, %arg5: memref<8x256xf32, #tpu.memory_space<vmem>>) attributes {dimension_semantics = [#tpu.dimension_semantics<parallel>, #tpu.dimension_semantics<arbitrary>], iteration_bounds = array<i64: 1, 1>, scalar_prefetch = 0 : i64, scratch_operands = 1 : i64, tpu.core_type = #tpu.core_type<tc>, window_params = [{transform_indices = @transform_0, window_bounds = array<i64: 8, 256>}, {transform_indices = @transform_1, window_bounds = array<i64: 8, 256>}, {transform_indices = @transform_2, window_bounds = array<i64: 1, 1, 128>}]} {
    %c0_i32 = arith.constant 0 : i32
    %0 = arith.cmpi eq, %arg1, %c0_i32 : i32
    %1 = arith.extui %0 : i1 to i32
    %c0_i32_0 = arith.constant 0 : i32
    %2 = arith.cmpi ne, %1, %c0_i32_0 : i32
    scf.if %2 {
      %cst_14 = arith.constant 0.000000e+00 : f32
      %38 = vector.broadcast %cst_14 : f32 to vector<8x256xf32>
      %c0_15 = arith.constant 0 : index
      %c0_16 = arith.constant 0 : index
      %39 = vector.load %arg5[%c0_15, %c0_16] : memref<8x256xf32, #tpu.memory_space<vmem>>, vector<8x256xf32>
      tpu.vector_store %arg5[%c0_15, %c0_16], %38 {strides = array<i32>} : memref<8x256xf32, #tpu.memory_space<vmem>>, vector<8x256xf32>,
    } else {
    }
    %c1_i32 = arith.constant 1 : i32
    %3 = arith.muli %arg0, %c1_i32 : i32
    %4 = arith.addi %3, %arg1 : i32
    %c8_i32 = arith.constant 8 : i32
    %5 = arith.muli %4, %c8_i32 : i32
    %c8_i32_1 = arith.constant 8 : i32
    %6 = arith.subi %c8_i32_1, %5 : i32
    %c0_i32_2 = arith.constant 0 : i32
    %c8_i32_3 = arith.constant 8 : i32
    %7 = arith.muli %c0_i32_2, %c8_i32_3 : i32
    %8 = tpu.assume_multiple %7, 8 : i32
    %9 = arith.index_cast %8 : i32 to index
    %c0 = arith.constant 0 : index
    %10 = vector.load %arg2[%9, %c0] : memref<8x256xf32, #tpu.memory_space<vmem>>, vector<8x256xf32>
    %11 = arith.index_cast %8 : i32 to index
    %c0_4 = arith.constant 0 : index
    %12 = vector.load %arg3[%11, %c0_4] : memref<8x256xf32, #tpu.memory_space<vmem>>, vector<8x256xf32>
    %cst = arith.constant 0.000000e+00 : f32
    %13 = vector.broadcast %cst : f32 to vector<8x256xf32>
    %14 = arith.maximumf %10, %13 : vector<8x256xf32>
    %15 = arith.mulf %10, %12 : vector<8x256xf32>
    %16 = arith.subf %14, %15 : vector<8x256xf32>
    %17 = math.absf %10 : vector<8x256xf32>
    %cst_5 = arith.constant 0.000000e+00 : f32
    %18 = vector.broadcast %cst_5 : f32 to vector<8x256xf32>
    %19 = arith.subf %18, %17 : vector<8x256xf32>
    %20 = math.exp %19 : vector<8x256xf32>
    %21 = math.log1p %20 : vector<8x256xf32>
    %22 = arith.addf %16, %21 : vector<8x256xf32>
    %23 = tpu.iota {dimensions = array<i32: 0>} : vector<8x1xi32>
    %24 = vector.broadcast %8 : i32 to vector<8x1xi32>
    %25 = arith.addi %23, %24 : vector<8x1xi32>
    %26 = vector.broadcast %6 : i32 to vector<8x1xi32>
    %27 = arith.cmpi slt, %25, %26 : vector<8x1xi32>
    %cst_6 = arith.constant 0.000000e+00 : f32
    %28 = vector.shape_cast %27 : vector<8x1xi1> to vector<8x1xi1>
    %29 = vector.broadcast %28 : vector<8x1xi1> to vector<8x256xi1>
    %30 = vector.broadcast %cst_6 : f32 to vector<8x256xf32>
    %31 = arith.select %29, %22, %30 : vector<8x256xi1>, vector<8x256xf32>
    %c0_7 = arith.constant 0 : index
    %c0_8 = arith.constant 0 : index
    %32 = vector.load %arg5[%c0_7, %c0_8] : memref<8x256xf32, #tpu.memory_space<vmem>>, vector<8x256xf32>
    %33 = arith.addf %32, %31 : vector<8x256xf32>
    %c0_9 = arith.constant 0 : index
    %c0_10 = arith.constant 0 : index
    %34 = vector.load %arg5[%c0_9, %c0_10] : memref<8x256xf32, #tpu.memory_space<vmem>>, vector<8x256xf32>
    tpu.vector_store %arg5[%c0_9, %c0_10], %33 {strides = array<i32>} : memref<8x256xf32, #tpu.memory_space<vmem>>, vector<8x256xf32>,
    %c1_i32_11 = arith.constant 1 : i32
    %c0_i32_12 = arith.constant 0 : i32
    %35 = arith.cmpi eq, %arg1, %c0_i32_12 : i32
    %36 = arith.extui %35 : i1 to i32
    %c0_i32_13 = arith.constant 0 : i32
    %37 = arith.cmpi ne, %36, %c0_i32_13 : i32
    scf.if %37 {
      %c0_14 = arith.constant 0 : index
      %c0_15 = arith.constant 0 : index
      %38 = vector.load %arg5[%c0_14, %c0_15] : memref<8x256xf32, #tpu.memory_space<vmem>>, vector<8x256xf32>
      %39 = vector.shape_cast %38 : vector<8x256xf32> to vector<1x8x256xf32>
      %cst_16 = arith.constant dense<0.000000e+00> : vector<1xf32>
      %40 = vector.multi_reduction <add>, %39, %cst_16 [1, 2] : vector<1x8x256xf32> to vector<1xf32>
      %41 = vector.shape_cast %40 : vector<1xf32> to vector<1x1x1xf32>
      %42 = vector.extract %41[0, 0, 0] : f32 from vector<1x1x1xf32>
      %43 = vector.broadcast %42 : f32 to vector<1x1x128xf32>
      %c0_17 = arith.constant 0 : index
      %c0_18 = arith.constant 0 : index
      %c0_19 = arith.constant 0 : index
      %44 = vector.load %arg4[%c0_17, %c0_18, %c0_19] : memref<1x1x128xf32, #tpu.memory_space<vmem>>, vector<1x1x128xf32>
      tpu.vector_store %arg4[%c0_17, %c0_18, %c0_19], %43 {strides = array<i32>} : memref<1x1x128xf32, #tpu.memory_space<vmem>>, vector<1x1x128xf32>,
    } else {
    }
    return
  }
  func.func @transform_0(%arg0: i32, %arg1: i32) -> (i32, i32) {
    %c1_i32 = arith.constant 1 : i32
    %0 = arith.muli %arg0, %c1_i32 : i32
    %1 = arith.addi %0, %arg1 : i32
    %c0_i32 = arith.constant 0 : i32
    %c0_i32_0 = arith.constant 0 : i32
    return %1, %c0_i32 : i32, i32
  }
  func.func @transform_1(%arg0: i32, %arg1: i32) -> (i32, i32) {
    %c1_i32 = arith.constant 1 : i32
    %0 = arith.muli %arg0, %c1_i32 : i32
    %1 = arith.addi %0, %arg1 : i32
    %c0_i32 = arith.constant 0 : i32
    %c0_i32_0 = arith.constant 0 : i32
    return %1, %c0_i32 : i32, i32
  }
  func.func @transform_2(%arg0: i32, %arg1: i32) -> (i32, i32, i32) {
    %c0_i32 = arith.constant 0 : i32
    %c0_i32_0 = arith.constant 0 : i32
    %c0_i32_1 = arith.constant 0 : i32
    return %arg0, %c0_i32, %c0_i32_0 : i32, i32, i32
  }
}

</mosaic_0001>

<llo_original>
// kernel: bce_loss_pallas.1
$region0: #{bce_loss_pallas.1}
  #allocation0 [shape = 'u32[]', space=smem, size = 0x4, offset = 0x4, fixed_abs, tag = 'smem constant byte address 0x4 - core index']
  #allocation1 [shape = 'u32[144,128]{1,0:T(1,128)}', space=vmem, size = 0x12000, scoped, tag = 'internal scratch']
  #allocation2 [shape = 'f32[8,256]{1,0:T(8,128)}', space=vmem, size = 0x2000, scoped, tag = 'scratch operand']
  %s0 = inlined_call_operand.vmem [shape: f32[8,256], index: 0, kind: input, shape index: {}]
  %s1 = inlined_call_operand.vmem [shape: f32[8,256], index: 1, kind: input, shape index: {}]
  %s2 = inlined_call_operand.hbm [shape: f32[1,1,128], index: 2, kind: output, shape index: {}]
  %s3 = sld [smem:[#allocation0]]
  $region26: #{bce_loss_pallas.1} parent=0
    _
  %s5 = ssub.s32 1, %s3
  %s6 = scalar_select 0, %s5, %s3
  $region1: #{bce_loss_pallas.1} parent=0
    #allocation3 [shape = 'u8[512]{0}', space=vmem, size = 0x400, scoped, tag = 'output window, operand 0, single buffered']
    #allocation4 [shape = 's32[1]{0}', space=sflag, size = 0x4, scoped, tag = 'scoped memory for bce_loss_pallas.1']
    %7 = vsyncpa [#allocation4], 0
    // Predicated region
    $region2: #{bce_loss_pallas.1} parent=1 // pred_check
      _
    $region3: #{bce_loss_pallas.1} parent=1 // pred_check_branch
      %9 = sbr.rel (0) target = $region5
    $region4: #{bce_loss_pallas.1} parent=1 // pred_region
      %s10 = sadd.s32 0, 0
      %p11 = scmp.lt.s32.totalorder %s10, 0
      %s12 = scalar_select %p11, %s10, 0
      %s13 = smul.addr %s12, 2
      %s14 = smul.addr %s13, 8
      %s15 = scalar_lea.vmem %s0, %s14
      %s16 = sadd.s32 0, 0
    $region5: #{bce_loss_pallas.1} parent=1 // pred_fallthru
      _
    // Predicated region
    $region6: #{bce_loss_pallas.1} parent=1 // pred_check
      _
    $region7: #{bce_loss_pallas.1} parent=1 // pred_check_branch
      %18 = sbr.rel (0) target = $region9
    $region8: #{bce_loss_pallas.1} parent=1 // pred_region
      %s19 = sadd.s32 0, 0
      %p20 = scmp.lt.s32.totalorder %s19, 0
      %s21 = scalar_select %p20, %s19, 0
      %s22 = smul.addr %s21, 2
      %s23 = smul.addr %s22, 8
      %s24 = scalar_lea.vmem %s1, %s23
      %s25 = sadd.s32 0, 0
    $region9: #{bce_loss_pallas.1} parent=1 // pred_fallthru
      _
    %s26 = sadd.s32 0, 0
    %p27 = scmp.lt.s32.totalorder %s26, 0
    %s28 = scalar_select %p27, %s26, 0
    %s29 = smul.addr %s28, 2
    %s30 = smul.addr %s29, 8
    %s31 = scalar_lea.vmem %s0, %s30
    %s32 = sadd.s32 0, 0
    %p33 = scmp.lt.s32.totalorder %s32, 0
    %s34 = scalar_select %p33, %s32, 0
    %s35 = smul.addr %s34, 2
    %s36 = smul.addr %s35, 8
    %s37 = scalar_lea.vmem %s1, %s36
    %s38 = sadd.s32 0, 0
    %p39 = scmp.lt.s32.totalorder %s38, 0
    %s40 = scalar_select %p39, %s38, 0
    %s41 = smul.addr %s40, 2
    %s42 = smul.addr %s41, 8
    %s43 = scalar_lea.vmem %s0, %s42
    %s44 = sadd.s32 0, 0
    %s45 = sadd.s32 0, 0
    %p46 = scmp.lt.s32.totalorder %s45, 0
    %s47 = scalar_select %p46, %s45, 0
    %s48 = smul.addr %s47, 2
    %s49 = smul.addr %s48, 8
    %s50 = scalar_lea.vmem %s1, %s49
    %s51 = sadd.s32 0, 0
    %p52 = scmp.eq.s32.totalorder 0, 0
    // Predicated region
    $region10: #{bce_loss_pallas.1} parent=1 // pred_check
      %p53 = pneg %p52
    $region11: #{bce_loss_pallas.1} parent=1 // pred_check_branch
      %55 = sbr.rel (%p53) target = $region13
    $region12: #{bce_loss_pallas.1} parent=1 // pred_region
      %56 = vst [vmem:[#allocation2] sm:$0xff] 0.0
      %57 = vst [vmem:[#allocation2 + $0x8] sm:$0xff] 0.0
    $region13: #{bce_loss_pallas.1} parent=1 // pred_fallthru
      _
    %s58 = sadd.s32 0, 0
    %s59 = smul.u32 %s58, 8
    %s60 = ssub.s32 8, %s59
    %s61 = smul.u32 0, 2
    %s62 = smul.addr %s61, 8
    %s63 = scalar_lea.vmem %s43, %s62
    %v64 = vld [vmem:[%s63] sm:$0xff]
    %v65 = vld [vmem:[%s63 + $0x8] sm:$0xff]
    %s66 = smul.addr %s61, 8
    %s67 = scalar_lea.vmem %s50, %s66
    %v68 = vld [vmem:[%s67] sm:$0xff]
    %v69 = vld [vmem:[%s67 + $0x8] sm:$0xff]
    %v70 = vmax.f32 %v64, 0.0
    %v71 = vmax.f32 %v65, 0.0
    %v72 = vmul.f32 %v64, %v68
    %v73 = vmul.f32 %v65, %v69
    %v74 = vsub.f32 %v70, %v72
    %v75 = vsub.f32 %v71, %v73
    %v76 = vand.u32 2147483647, %v64
    %v77 = vand.u32 2147483647, %v65
    %v78 = vsub.f32 0.0, %v76
    %v79 = vsub.f32 0.0, %v77
    %v80 = vmul.f32 %v78, 1.442695
    %v81 = vpow.pop %v80
    %v82 = vmul.f32 %v79, 1.442695
    %v83 = vpow.pop %v82
    %v84 = vadd.f32 %v81, 1.0
    %v85 = vlog2.pop %v84
    %v86 = vmul.f32 %v85, 0.6931472
    %v87 = vmul.f32 -0.5, %v81
    %v88 = vadd.f32 %v87, 1.0
    %v89 = vmul.f32 %v88, %v81
    %v90 = vand.u32 2147483647, %v81
    %vm91 = vcmp.lt.f32.partialorder %v90, 0.0004427343
    %v92 = vsel %vm91, %v89, %v86
    %v93 = vadd.f32 %v83, 1.0
    %v94 = vlog2.pop %v93
    %v95 = vmul.f32 %v94, 0.6931472
    %v96 = vmul.f32 -0.5, %v83
    %v97 = vadd.f32 %v96, 1.0
    %v98 = vmul.f32 %v97, %v83
    %v99 = vand.u32 2147483647, %v83
    %vm100 = vcmp.lt.f32.partialorder %v99, 0.0004427343
    %v101 = vsel %vm100, %v98, %v95
    %v102 = vadd.f32 %v74, %v92
    %v103 = vadd.f32 %v75, %v101
    %v104 = vlaneseq
    %v105 = vshrl.u32 %v104, 7
    %v106 = vstv 0
    %v107 = vadd.s32 %v105, %v106
    %v108 = vstv %s60
    %vm109 = vcmp.lt.s32.totalorder %v107, %v108
    %v110 = vsel %vm109, 1, 0
    %vm111 = vcmp.eq.s32.totalorder %v110, 1
    %v112 = vsel %vm111, %v102, 0.0
    %v113 = vsel %vm111, %v103, 0.0
    %v114 = vld [vmem:[#allocation2] sm:$0xff]
    %v115 = vld [vmem:[#allocation2 + $0x8] sm:$0xff]
    %v116 = vadd.f32 %v114, %v112
    %v117 = vadd.f32 %v115, %v113
    %118 = vst [vmem:[#allocation2] sm:$0xff] %v116
    %119 = vst [vmem:[#allocation2 + $0x8] sm:$0xff] %v117
    // Predicated region
    $region14: #{bce_loss_pallas.1} parent=1 // pred_check
      %p120 = pneg %p52
    $region15: #{bce_loss_pallas.1} parent=1 // pred_check_branch
      %122 = sbr.rel (%p120) target = $region17
    $region16: #{bce_loss_pallas.1} parent=1 // pred_region
      %v123 = vld [vmem:[#allocation2] sm:$0xff]
      %v124 = vld [vmem:[#allocation2 + $0x8] sm:$0xff]
      %v125 = vadd.f32 %v123, %v124
      %126 = vadd.xlane.f32.xlu0 %v125
      %v127 = vpop.xlane.xlu0 %126
      %v128 = vrot.slane %v127, 4
      %v129 = vadd.f32 %v127, %v128
      %v130 = vrot.slane %v129, 2
      %v131 = vadd.f32 %v129, %v130
      %v132 = vrot.slane %v131, 1
      %v133 = vadd.f32 %v131, %v132
      %s134 = vtos %v133
      %v135 = vstv %s134
      %136 = vst [vmem:[#allocation3] sm:$0x1] %v135
    $region17: #{bce_loss_pallas.1} parent=1 // pred_fallthru
      _
    // Predicated region
    $region18: #{bce_loss_pallas.1} parent=1 // pred_check
      _
    $region19: #{bce_loss_pallas.1} parent=1 // pred_check_branch
      %138 = sbr.rel (0) target = $region21
    $region20: #{bce_loss_pallas.1} parent=1 // pred_region
      %s140 = ssub.s32 16, 16
      %141 = vsyncadd [#allocation4], %s140
      %s143 = sshll.u32 [#allocation3], 4
      %s144 = int_to_ptr.vmem [resolvable:$true] %s143
      %146 = dma.vmem_to_hbm [thread:$0]  %s144, 16, %s2, [#allocation4]
    $region21: #{bce_loss_pallas.1} parent=1 // pred_fallthru
      _
    // Predicated region
    $region22: #{bce_loss_pallas.1} parent=1 // pred_check
      _
    $region23: #{bce_loss_pallas.1} parent=1 // pred_check_branch
      %148 = sbr.rel (0) target = $region25
    $region24: #{bce_loss_pallas.1} parent=1 // pred_region
      %149 = dma.done [#allocation4], 16
    $region25: #{bce_loss_pallas.1} parent=1 // pred_fallthru
      _
    %150 = vsyncpa [#allocation4], 1

</llo_original>
